<compile_context>
chip_gen: v5e
topology: v5e:2x2
jax: 0.10.0
libtpu: 0.0.40
codegen_flags: <defaults>
</compile_context>

<pallas_src>
import functools

import jax
import jax.numpy as jnp
from jax.experimental import pallas as pl
from jax.experimental.pallas import tpu as pltpu

_LANE = 128
_SUBLANE = 8


def _round_up(n, m):
    return ((n + m - 1) // m) * m


@functools.lru_cache(maxsize=1)
def _chip_config():
    """Per-generation tuning knobs (safe fallbacks if detection fails)."""
    try:
        kind = jax.devices()[0].device_kind.lower()
    except Exception:
        kind = ""
    if "v7" in kind:
        # 2 TensorCores, 64 MiB physical / 32 MiB scoped VMEM.
        return dict(num_tcs=2, vmem_budget=28 << 20, small_b=1024, tm_cap=8192)
    if "v5" in kind and ("lite" in kind or "v5e" in kind):
        # 1 TensorCore, 16 MiB default scoped VMEM.
        return dict(num_tcs=1, vmem_budget=14 << 20, small_b=4096, tm_cap=4096)
    # v6e-like default: 1 TensorCore, 32 MiB scoped VMEM.
    return dict(num_tcs=1, vmem_budget=28 << 20, small_b=4096, tm_cap=8192)


def _linear_kernel(x_ref, w_ref, b_ref, o_ref):
    # x_ref: (tm, K), w_ref: (K, n_pad), b_ref: (1, n_pad), o_ref: (tm, n_out)
    # where n_out == N (tiled path, unpadded HBM output) or n_pad (single-block
    # path).  The accumulator stays lane-dense (n_pad wide); only the needed
    # lanes are stored.
    n_out = o_ref.shape[-1]
    acc = jnp.dot(x_ref[...], w_ref[...], preferred_element_type=jnp.float32)
    acc = acc + b_ref[...]
    o_ref[...] = acc[:, :n_out].astype(o_ref.dtype)


def prepare_params(weight, bias):
    """One-time parameter prep (hoisted out of the per-call forward).

    weight: (N, K) PyTorch nn.Linear layout; bias: (N,).
    Returns (weight^T lane-padded to (K, n_pad), bias as (1, n_pad))."""
    N, K = weight.shape
    n_pad = _round_up(N, _LANE)
    if n_pad != N:
        weight = jnp.pad(weight, ((0, n_pad - N), (0, 0)))
        bias = jnp.pad(bias, (0, n_pad - N))
    return jnp.transpose(weight), bias.reshape(1, n_pad)


@functools.partial(jax.jit, static_argnames=("out_features",))
def logistic_regression_forward(x, w_t_padded, bias_padded, *, out_features):
    """x: (B, K) f32; w_t_padded: (K, n_pad) f32; bias_padded: (1, n_pad) f32.
    Returns (B, out_features) f32 logits."""
    B, K = x.shape
    K2, n_pad = w_t_padded.shape
    assert K == K2
    N = out_features
    cfg = _chip_config()

    if B <= cfg["small_b"]:
        # Single block, whole-array VMEM residency, no grid -> no pipeline
        # prologue/epilogue.  Keep the lane-dense padded output here (full vst);
        # the tiny wrapper slice on N is negligible at this size.
        out = pl.pallas_call(
            _linear_kernel,
            out_shape=jax.ShapeDtypeStruct((B, n_pad), x.dtype),
            in_specs=[
                pl.BlockSpec(memory_space=pltpu.MemorySpace.VMEM),
                pl.BlockSpec(memory_space=pltpu.MemorySpace.VMEM),
                pl.BlockSpec(memory_space=pltpu.MemorySpace.VMEM),
            ],
            out_specs=pl.BlockSpec(memory_space=pltpu.MemorySpace.VMEM),
        )(x, w_t_padded, bias_padded)
        return out[:, :N]

    # ---- Tiled path: tile only B; W/bias resident; unpadded (B_rows, N) output.
    k_lanes = _round_up(K, _LANE)
    out_lanes = _round_up(N, _LANE)

    # Pick tm: big enough to amortize per-step pipeline cost, small enough to
    # keep >= ~4 grid steps per TensorCore and to fit the scoped-VMEM budget
    # (byte math uses lane-padded widths).
    bytes_per_row = 2 * (k_lanes + out_lanes) * 4      # double-buffered x + out
    tm_vmem = (cfg["vmem_budget"] - (4 << 20)) // bytes_per_row
    tm_steps = max(B // (cfg["num_tcs"] * 4), 1024)
    tm = min(cfg["tm_cap"], tm_vmem, tm_steps)
    tm = int(max(512, (tm // 512) * 512))

    b_rows = _round_up(B, tm)
    x_p = jnp.pad(x, ((0, b_rows - B), (0, 0))) if b_rows != B else x

    # Honest VMEM accounting (lane/sublane padded): double-buffered x + out
    # tiles plus the resident (double-buffered) weight and bias, with headroom.
    need = (2 * tm * k_lanes * 4
            + 2 * tm * out_lanes * 4
            + 2 * _round_up(K, _SUBLANE) * n_pad * 4
            + 2 * _SUBLANE * n_pad * 4)
    vmem_limit = int(min(cfg["vmem_budget"], need + (4 << 20)))

    out = pl.pallas_call(
        _linear_kernel,
        out_shape=jax.ShapeDtypeStruct((b_rows, N), x.dtype),
        grid=(b_rows // tm,),
        in_specs=[
            pl.BlockSpec((tm, K), lambda i: (i, 0)),
            pl.BlockSpec((K, n_pad), lambda i: (0, 0)),
            pl.BlockSpec((1, n_pad), lambda i: (0, 0)),
        ],
        out_specs=pl.BlockSpec((tm, N), lambda i: (i, 0)),
        compiler_params=pltpu.CompilerParams(
            dimension_semantics=("parallel",),          # 2-TC sharding on v7x
            vmem_limit_bytes=vmem_limit),
    )(x_p, w_t_padded, bias_padded)
    return out[:B] if b_rows != B else out


if __name__ == "__main__":
    # Deterministic synthetic parameters (no checkpoint loading).
    key = jax.random.PRNGKey(0)
    k_x, k_w, k_b, k_x2 = jax.random.split(key, 4)

    batch = 8
    input_size = 32
    output_size = 16

    x = jax.random.normal(k_x, (batch, input_size), dtype=jnp.float32)
    # Match nn.Linear default init scale: U(-1/sqrt(fan_in), 1/sqrt(fan_in))
    bound = 1.0 / (input_size ** 0.5)
    weight = jax.random.uniform(k_w, (output_size, input_size),
                                minval=-bound, maxval=bound, dtype=jnp.float32)
    bias = jax.random.uniform(k_b, (output_size,),
                              minval=-bound, maxval=bound, dtype=jnp.float32)

    # One-time parameter preparation (pad N to 128 lanes, transpose to (K, n_pad)).
    w_prep, b_prep = prepare_params(weight, bias)

    # Small-batch / single-block path.
    out = logistic_regression_forward(x, w_prep, b_prep, out_features=output_size)
    jax.block_until_ready(out)
    ref = x @ weight.T + bias
    assert out.shape == (batch, output_size)
    assert jnp.allclose(out, ref, atol=1e-5, rtol=1e-5)

    # Larger batch to exercise the B-tiled (grid) path on every generation.
    big_batch = 16384
    x_big = jax.random.normal(k_x2, (big_batch, input_size), dtype=jnp.float32)
    out_big = logistic_regression_forward(x_big, w_prep, b_prep,
                                          out_features=output_size)
    jax.block_until_ready(out_big)
    ref_big = x_big @ weight.T + bias
    assert out_big.shape == (big_batch, output_size)
    assert jnp.allclose(out_big, ref_big, atol=1e-4, rtol=1e-5)

    # NOTE: forward() of the reference module is purely linear (no sigmoid),
    # so no activation is fused here.
    print("KERNEL_OK")
</pallas_src>

<mosaic_0001>
module attributes {stable_mosaic.version = 11 : i64} {
  func.func @_linear_kernel(%arg0: memref<8x32xf32, #tpu.memory_space<vmem>>, %arg1: memref<32x128xf32, #tpu.memory_space<vmem>>, %arg2: memref<1x128xf32, #tpu.memory_space<vmem>>, %arg3: memref<8x128xf32, #tpu.memory_space<vmem>>) attributes {dimension_semantics = [], scalar_prefetch = 0 : i64, scratch_operands = 0 : i64, tpu.core_type = #tpu.core_type<tc>} {
    %c0 = arith.constant 0 : index
    %c0_0 = arith.constant 0 : index
    %0 = vector.load %arg0[%c0, %c0_0] : memref<8x32xf32, #tpu.memory_space<vmem>>, vector<8x32xf32>
    %c0_1 = arith.constant 0 : index
    %c0_2 = arith.constant 0 : index
    %1 = vector.load %arg1[%c0_1, %c0_2] : memref<32x128xf32, #tpu.memory_space<vmem>>, vector<32x128xf32>
    %cst = arith.constant dense<0.000000e+00> : vector<8x128xf32>
    %2 = tpu.matmul %0, %1, %cst {dimension_numbers = #tpu.dot_dimension_numbers<[1], [0], [0], [1], [0, 0, 1, 1], [], []>} : vector<8x32xf32>, vector<32x128xf32>, vector<8x128xf32> -> vector<8x128xf32>
    %c0_3 = arith.constant 0 : index
    %c0_4 = arith.constant 0 : index
    %3 = vector.load %arg2[%c0_3, %c0_4] : memref<1x128xf32, #tpu.memory_space<vmem>>, vector<1x128xf32>
    %4 = vector.broadcast %3 : vector<1x128xf32> to vector<8x128xf32>
    %5 = arith.addf %2, %4 : vector<8x128xf32>
    %c0_5 = arith.constant 0 : index
    %c0_6 = arith.constant 0 : index
    %6 = vector.load %arg3[%c0_5, %c0_6] : memref<8x128xf32, #tpu.memory_space<vmem>>, vector<8x128xf32>
    tpu.vector_store %arg3[%c0_5, %c0_6], %5 {strides = array<i32>} : memref<8x128xf32, #tpu.memory_space<vmem>>, vector<8x128xf32>,
    return
  }
}

</mosaic_0001>

<llo_original>
// kernel: logistic_regression_forward.1
$region0: #{logistic_regression_forward.1}
  #allocation0 [shape = 'u32[]', space=smem, size = 0x4, offset = 0x4, fixed_abs, tag = 'smem constant byte address 0x4 - core index']
  #allocation1 [shape = 'u32[72,128]{1,0:T(1,128)}', space=vmem, size = 0x9000, scoped, tag = 'internal scratch']
  %s0 = inlined_call_operand.hbm [shape: f32[8,32], index: 0, kind: input, shape index: {}]
  %s1 = inlined_call_operand.hbm [shape: f32[32,128], index: 1, kind: input, shape index: {}]
  %s2 = inlined_call_operand.vmem [shape: f32[1,128], index: 2, kind: input, shape index: {}]
  %s3 = inlined_call_operand.hbm [shape: f32[8,128], index: 3, kind: output, shape index: {}]
  %s4 = sld [smem:[#allocation0]]
  $region30: #{logistic_regression_forward.1} parent=0
    _
  %s6 = ssub.s32 1, %s4
  %s7 = scalar_select 0, %s6, %s4
  $region1: #{logistic_regression_forward.1} parent=0
    #allocation2 [shape = 'u8[4096]{0}', space=vmem, size = 0x1000, scoped, tag = 'input window, operand 0, single buffered']
    #allocation3 [shape = 's32[1]{0}', space=sflag, size = 0x4, scoped, tag = 'scoped memory for logistic_regression_forward.1']
    #allocation4 [shape = 's32[1]{0}', space=sflag, size = 0x4, scoped, tag = 'scoped memory for logistic_regression_forward.1']
    #allocation5 [shape = 'u8[16384]{0}', space=vmem, size = 0x4000, scoped, tag = 'input window, operand 1, single buffered']
    #allocation6 [shape = 's32[1]{0}', space=sflag, size = 0x4, scoped, tag = 'scoped memory for logistic_regression_forward.1']
    #allocation7 [shape = 'u8[4096]{0}', space=vmem, size = 0x1000, scoped, tag = 'output window, operand 0, single buffered']
    %8 = vsyncpa [#allocation3], 0
    %9 = vsyncpa [#allocation6], 0
    %10 = vsyncpa [#allocation4], 0
    // Predicated region
    $region2: #{logistic_regression_forward.1} parent=1 // pred_check
      _
    $region3: #{logistic_regression_forward.1} parent=1 // pred_check_branch
      %12 = sbr.rel (0) target = $region5
    $region4: #{logistic_regression_forward.1} parent=1 // pred_region
      %14 = vsyncadd [#allocation3], 0
      %s16 = sshll.u32 %s0, 4
      %s17 = int_to_ptr.hbm [resolvable:$true] %s16
      %s18 = sshll.u32 [#allocation2], 4
      %s19 = int_to_ptr.vmem [resolvable:$true] %s18
      %21 = dma.hbm_to_vmem [thread:$0]  %s17, 128, %s19, [#allocation3]
    $region5: #{logistic_regression_forward.1} parent=1 // pred_fallthru
      _
    // Predicated region
    $region6: #{logistic_regression_forward.1} parent=1 // pred_check
      _
    $region7: #{logistic_regression_forward.1} parent=1 // pred_check_branch
      %23 = sbr.rel (0) target = $region9
    $region8: #{logistic_regression_forward.1} parent=1 // pred_region
      %25 = vsyncadd [#allocation6], 0
      %s26 = sshll.u32 %s1, 4
      %s27 = int_to_ptr.hbm [resolvable:$true] %s26
      %s28 = sshll.u32 [#allocation5], 4
      %s29 = int_to_ptr.vmem [resolvable:$true] %s28
      %34 = dma.hbm_to_vmem [thread:$0]  %s27, 512, %s29, [#allocation6], 128, 128, 8
    $region9: #{logistic_regression_forward.1} parent=1 // pred_fallthru
      _
    // Predicated region
    $region10: #{logistic_regression_forward.1} parent=1 // pred_check
      _
    $region11: #{logistic_regression_forward.1} parent=1 // pred_check_branch
      %36 = sbr.rel (0) target = $region13
    $region12: #{logistic_regression_forward.1} parent=1 // pred_region
      _
    $region13: #{logistic_regression_forward.1} parent=1 // pred_fallthru
      _
    // Predicated region
    $region14: #{logistic_regression_forward.1} parent=1 // pred_check
      _
    $region15: #{logistic_regression_forward.1} parent=1 // pred_check_branch
      %38 = sbr.rel (0) target = $region17
    $region16: #{logistic_regression_forward.1} parent=1 // pred_region
      %40 = dma.done [#allocation3], 128
    $region17: #{logistic_regression_forward.1} parent=1 // pred_fallthru
      _
    // Predicated region
    $region18: #{logistic_regression_forward.1} parent=1 // pred_check
      _
    $region19: #{logistic_regression_forward.1} parent=1 // pred_check_branch
      %42 = sbr.rel (0) target = $region21
    $region20: #{logistic_regression_forward.1} parent=1 // pred_region
      %44 = dma.done [#allocation6], 512
    $region21: #{logistic_regression_forward.1} parent=1 // pred_fallthru
      _
    %v45 = vld [vmem:[#allocation2] sm:$0xff]
    %v46 = vld [vmem:[#allocation5] sm:$0xff]
    %v47 = vld [vmem:[#allocation5 + $0x8] sm:$0xff]
    %v48 = vld [vmem:[#allocation5 + $0x10] sm:$0xff]
    %v49 = vld [vmem:[#allocation5 + $0x18] sm:$0xff]
    %v50 = vld [vmem:[%s2] sm:$0x1]
    %v52 = vperm.slane %v50, 0
    %vm54 = vcmask 261120
    %v56 = vsel %vm54, %v45, 0
    %58 = vmatpush.msra.mxu0 0.0
    %59 = vmatpush.msra.mxu0 0.0
    %60 = vmatpush.msra.mxu0 0.0
    %61 = vmatpush.msra.mxu0 0.0
    %62 = vmatpush.msra.mxu0 0.0
    %63 = vmatpush.msra.mxu0 0.0
    %64 = vmatpush.msra.mxu0 0.0
    %65 = vmatpush.msra.mxu0 0.0
    %66 = vmatpush.msra.mxu0 0.0
    %67 = vmatpush.msra.mxu0 0.0
    %68 = vmatpush.msra.mxu0 0.0
    %69 = vmatpush.msra.mxu0 0.0
    %70 = vmatpush.msra.mxu0 %v49
    %71 = vmatpush.msra.mxu0 %v48
    %72 = vmatpush.msra.mxu0 %v47
    %73 = vmatpush.msra.mxu0 %v46
    %74 = vmatmul.f32.gmra.mxu0 %v56
    %v75 = vpop.f32.mrf.mxu0
    %v76 = vadd.f32 %v52, %v75
    %77 = vdwg.mxu0
    %78 = vst [vmem:[#allocation7] sm:$0xff] %v76
    // Predicated region
    $region22: #{logistic_regression_forward.1} parent=1 // pred_check
      _
    $region23: #{logistic_regression_forward.1} parent=1 // pred_check_branch
      %80 = sbr.rel (0) target = $region25
    $region24: #{logistic_regression_forward.1} parent=1 // pred_region
      %82 = vsyncadd [#allocation4], 0
      %s84 = sshll.u32 [#allocation7], 4
      %s85 = int_to_ptr.vmem [resolvable:$true] %s84
      %s86 = sshll.u32 %s3, 4
      %s87 = int_to_ptr.hbm [resolvable:$true] %s86
      %89 = dma.vmem_to_hbm [thread:$0]  %s85, 128, %s87, [#allocation4]
    $region25: #{logistic_regression_forward.1} parent=1 // pred_fallthru
      _
    // Predicated region
    $region26: #{logistic_regression_forward.1} parent=1 // pred_check
      _
    $region27: #{logistic_regression_forward.1} parent=1 // pred_check_branch
      %91 = sbr.rel (0) target = $region29
    $region28: #{logistic_regression_forward.1} parent=1 // pred_region
      %93 = dma.done [#allocation4], 128
    $region29: #{logistic_regression_forward.1} parent=1 // pred_fallthru
      _
    %94 = vsyncpa [#allocation3], 1
    %95 = vsyncpa [#allocation6], 1
    %96 = vsyncpa [#allocation4], 1

</llo_original>
